<compile_context>
chip_gen: v6e
topology: v6e:2x2x1
jax: 0.10.0
libtpu: 0.0.40
codegen_flags: <defaults>
</compile_context>

<pallas_src>
import functools

import jax
import jax.numpy as jnp
from jax.experimental import pallas as pl
from jax.experimental.pallas import tpu as pltpu


def _dim(shape):
    d = 1
    for s in shape:
        d *= s
    return d


def _round_up(n, m):
    return ((n + m - 1) // m) * m


def _sn2h_kernel(x_ref, w1_ref, b1_ref, w2_ref, b2_ref, o_ref, *, bound):
    # x_ref:  (TB, Din) bf16    w1_ref: (Din, M) bf16   b1_ref: (1, M)  f32
    # w2_ref: (M, Dp)   bf16    b2_ref: (1, Dp)  f32    o_ref:  (TB, Dp) f32
    # fc1 (bf16 operands, f32 accumulation) + afunc (tanh, f32 on the EUP)
    h = jnp.dot(x_ref[...], w1_ref[...], preferred_element_type=jnp.float32)
    h = jnp.tanh(h + b1_ref[...])
    # fc2 (bf16 operands, f32 accumulation)
    z = jnp.dot(h.astype(w2_ref.dtype), w2_ref[...],
                preferred_element_type=jnp.float32) + b2_ref[...]
    # F.hardtanh(out, min_val=-bound, max_val=bound)
    o_ref[...] = jnp.clip(z, -bound, bound).astype(o_ref.dtype)


def sn2h_forward(x, w1, b1, w2, b2, bound, *, tb_max=512):
    """x: (B, ...) flattening to dim_in per example.
    w1: (dim_in, module_size), b1: (module_size,),
    w2: (module_size, dim_out), b2: (dim_out,)."""
    B = x.shape[0]
    x2d = x.reshape(B, -1).astype(jnp.bfloat16)          # torch .view(B, -1)
    din = x2d.shape[1]
    m = w1.shape[1]
    dout = w2.shape[1]
    dpad = _round_up(dout, 128)                          # lane-dense output

    w1b = w1.astype(jnp.bfloat16)
    w2p = jnp.zeros((m, dpad), jnp.bfloat16).at[:, :dout].set(
        w2.astype(jnp.bfloat16))
    b1_2d = b1.reshape(1, m).astype(jnp.float32)
    b2p = jnp.zeros((1, dpad), jnp.float32).at[0, :dout].set(
        b2.astype(jnp.float32))

    # Batch tile: full batch if small (block == full array dim is always legal);
    # otherwise a sublane-aligned tile (512 is a multiple of 16 for bf16) that
    # keeps double-buffered x well inside every generation's VMEM.
    tb = B if B <= tb_max else tb_max
    grid = (pl.cdiv(B, tb),)

    kernel = functools.partial(_sn2h_kernel, bound=float(bound))

    cost = pl.CostEstimate(
        flops=2 * B * (din * m + m * dpad),
        transcendentals=B * m,
        bytes_accessed=(x2d.size * 2 + w1b.size * 2 + w2p.size * 2
                        + b1_2d.size * 4 + b2p.size * 4 + B * dpad * 4),
    )

    out = pl.pallas_call(
        kernel,
        out_shape=jax.ShapeDtypeStruct((B, dpad), jnp.float32),
        grid_spec=pltpu.PrefetchScalarGridSpec(
            num_scalar_prefetch=0,
            grid=grid,
            in_specs=[
                pl.BlockSpec((tb, din), lambda i: (i, 0)),    # x: streamed per tile
                pl.BlockSpec((din, m), lambda i: (0, 0)),     # w1: VMEM-resident
                pl.BlockSpec((1, m), lambda i: (0, 0)),       # b1: VMEM-resident
                pl.BlockSpec((m, dpad), lambda i: (0, 0)),    # w2 (padded): resident
                pl.BlockSpec((1, dpad), lambda i: (0, 0)),    # b2 (padded): resident
            ],
            out_specs=pl.BlockSpec((tb, dpad), lambda i: (i, 0)),
        ),
        compiler_params=pltpu.CompilerParams(
            dimension_semantics=("parallel",)),
        cost_estimate=cost,
    )(x2d, w1b, b1_2d, w2p, b2p)
    return out[:, :dout]


def sn2h_reference(x, w1, b1, w2, b2, bound, *, bf16_operands=True):
    """Pure-JAX reference. With bf16_operands=True it mirrors the kernel's
    operand dtypes (f32 accumulation) so the comparison can stay tight."""
    B = x.shape[0]
    x2d = x.reshape(B, -1)
    if bf16_operands:
        h = jnp.dot(x2d.astype(jnp.bfloat16), w1.astype(jnp.bfloat16),
                    preferred_element_type=jnp.float32) + b1
        h = jnp.tanh(h)
        z = jnp.dot(h.astype(jnp.bfloat16), w2.astype(jnp.bfloat16),
                    preferred_element_type=jnp.float32) + b2
    else:
        h = jnp.tanh(x2d @ w1 + b1)
        z = h @ w2 + b2
    return jnp.clip(z, -bound, bound)


if __name__ == "__main__":
    # Module hyperparameters (shapes consistent with the PyTorch module).
    shape_in = (4, 16, 16)        # per-example input shape -> dim_in = 1024
    dim_in = _dim(shape_in)
    module_size = 32
    dim_out = 8
    bound = 2.5
    batch = 2

    key = jax.random.PRNGKey(0)
    kx, k1, k2, k3, k4 = jax.random.split(key, 5)

    # Deterministic "PyTorch-like" uniform init: U(-1/sqrt(fan_in), 1/sqrt(fan_in)).
    lim1 = 1.0 / jnp.sqrt(jnp.float32(dim_in))
    lim2 = 1.0 / jnp.sqrt(jnp.float32(module_size))
    w1 = jax.random.uniform(k1, (dim_in, module_size), jnp.float32, -lim1, lim1)
    b1 = jax.random.uniform(k2, (module_size,), jnp.float32, -lim1, lim1)
    w2 = jax.random.uniform(k3, (module_size, dim_out), jnp.float32, -lim2, lim2)
    b2 = jax.random.uniform(k4, (dim_out,), jnp.float32, -lim2, lim2)

    x = jax.random.normal(kx, (batch,) + shape_in, jnp.float32)   # NCHW

    out = sn2h_forward(x, w1, b1, w2, b2, bound)
    out = jax.block_until_ready(out)
    assert out.shape == (batch, dim_out)

    # Tight check against a reference using the same bf16 operand dtypes.
    ref_bf16 = sn2h_reference(x, w1, b1, w2, b2, bound, bf16_operands=True)
    assert jnp.allclose(out, ref_bf16, atol=5e-3, rtol=5e-3), \
        "mismatch vs bf16-operand reference"

    # Loose sanity check against the pure-f32 reference (bf16 operand rounding).
    ref_f32 = sn2h_reference(x, w1, b1, w2, b2, bound, bf16_operands=False)
    assert jnp.allclose(out, ref_f32, atol=3e-2, rtol=3e-2), \
        "mismatch vs f32 reference"

    print("KERNEL_OK")
</pallas_src>

<mosaic_0001>
module attributes {stable_mosaic.version = 11 : i64} {
  func.func @_sn2h_kernel(%arg0: i32, %arg1: memref<2x1024xbf16, #tpu.memory_space<vmem>>, %arg2: memref<1024x32xbf16, #tpu.memory_space<vmem>>, %arg3: memref<1x32xf32, #tpu.memory_space<vmem>>, %arg4: memref<32x128xbf16, #tpu.memory_space<vmem>>, %arg5: memref<1x128xf32, #tpu.memory_space<vmem>>, %arg6: memref<2x128xf32, #tpu.memory_space<vmem>>) attributes {dimension_semantics = [#tpu.dimension_semantics<parallel>], iteration_bounds = array<i64: 1>, scalar_prefetch = 0 : i64, scratch_operands = 0 : i64, tpu.core_type = #tpu.core_type<tc>, window_params = [{transform_indices = @transform_0, window_bounds = array<i64: 2, 1024>}, {pipeline_mode = #tpu.pipeline_mode<synchronous>, transform_indices = @transform_1, window_bounds = array<i64: 1024, 32>}, {pipeline_mode = #tpu.pipeline_mode<synchronous>, transform_indices = @transform_2, window_bounds = array<i64: 1, 32>}, {pipeline_mode = #tpu.pipeline_mode<synchronous>, transform_indices = @transform_3, window_bounds = array<i64: 32, 128>}, {pipeline_mode = #tpu.pipeline_mode<synchronous>, transform_indices = @transform_4, window_bounds = array<i64: 1, 128>}, {transform_indices = @transform_5, window_bounds = array<i64: 2, 128>}]} {
    %c0 = arith.constant 0 : index
    %c0_0 = arith.constant 0 : index
    %0 = vector.load %arg1[%c0, %c0_0] : memref<2x1024xbf16, #tpu.memory_space<vmem>>, vector<2x1024xbf16>
    %c0_1 = arith.constant 0 : index
    %c0_2 = arith.constant 0 : index
    %1 = vector.load %arg2[%c0_1, %c0_2] : memref<1024x32xbf16, #tpu.memory_space<vmem>>, vector<1024x32xbf16>
    %cst = arith.constant dense<0.000000e+00> : vector<2x32xf32>
    %2 = tpu.matmul %0, %1, %cst {dimension_numbers = #tpu.dot_dimension_numbers<[1], [0], [0], [1], [0, 0, 1, 1], [], []>} : vector<2x1024xbf16>, vector<1024x32xbf16>, vector<2x32xf32> -> vector<2x32xf32>
    %c0_3 = arith.constant 0 : index
    %c0_4 = arith.constant 0 : index
    %3 = vector.load %arg3[%c0_3, %c0_4] : memref<1x32xf32, #tpu.memory_space<vmem>>, vector<1x32xf32>
    %4 = vector.broadcast %3 : vector<1x32xf32> to vector<2x32xf32>
    %5 = arith.addf %2, %4 : vector<2x32xf32>
    %6 = math.tanh %5 : vector<2x32xf32>
    %7 = arith.truncf %6 : vector<2x32xf32> to vector<2x32xbf16>
    %c0_5 = arith.constant 0 : index
    %c0_6 = arith.constant 0 : index
    %8 = vector.load %arg4[%c0_5, %c0_6] : memref<32x128xbf16, #tpu.memory_space<vmem>>, vector<32x128xbf16>
    %cst_7 = arith.constant dense<0.000000e+00> : vector<2x128xf32>
    %9 = tpu.matmul %7, %8, %cst_7 {dimension_numbers = #tpu.dot_dimension_numbers<[1], [0], [0], [1], [0, 0, 1, 1], [], []>} : vector<2x32xbf16>, vector<32x128xbf16>, vector<2x128xf32> -> vector<2x128xf32>
    %c0_8 = arith.constant 0 : index
    %c0_9 = arith.constant 0 : index
    %10 = vector.load %arg5[%c0_8, %c0_9] : memref<1x128xf32, #tpu.memory_space<vmem>>, vector<1x128xf32>
    %11 = vector.broadcast %10 : vector<1x128xf32> to vector<2x128xf32>
    %12 = arith.addf %9, %11 : vector<2x128xf32>
    %cst_10 = arith.constant -2.500000e+00 : f32
    %cst_11 = arith.constant 2.500000e+00 : f32
    %13 = vector.broadcast %cst_10 : f32 to vector<2x128xf32>
    %14 = arith.maximumf %13, %12 : vector<2x128xf32>
    %15 = vector.broadcast %cst_11 : f32 to vector<2x128xf32>
    %16 = arith.minimumf %15, %14 : vector<2x128xf32>
    %c0_12 = arith.constant 0 : index
    %c0_13 = arith.constant 0 : index
    %17 = vector.load %arg6[%c0_12, %c0_13] : memref<2x128xf32, #tpu.memory_space<vmem>>, vector<2x128xf32>
    tpu.vector_store %arg6[%c0_12, %c0_13], %16 {strides = array<i32>} : memref<2x128xf32, #tpu.memory_space<vmem>>, vector<2x128xf32>,
    return
  }
  func.func @transform_0(%arg0: i32) -> (i32, i32) {
    %c0_i32 = arith.constant 0 : i32
    %c0_i32_0 = arith.constant 0 : i32
    return %arg0, %c0_i32 : i32, i32
  }
  func.func @transform_1(%arg0: i32) -> (i32, i32) {
    %c0_i32 = arith.constant 0 : i32
    %c0_i32_0 = arith.constant 0 : i32
    %c0_i32_1 = arith.constant 0 : i32
    return %c0_i32, %c0_i32_0 : i32, i32
  }
  func.func @transform_2(%arg0: i32) -> (i32, i32) {
    %c0_i32 = arith.constant 0 : i32
    %c0_i32_0 = arith.constant 0 : i32
    %c0_i32_1 = arith.constant 0 : i32
    return %c0_i32, %c0_i32_0 : i32, i32
  }
  func.func @transform_3(%arg0: i32) -> (i32, i32) {
    %c0_i32 = arith.constant 0 : i32
    %c0_i32_0 = arith.constant 0 : i32
    %c0_i32_1 = arith.constant 0 : i32
    return %c0_i32, %c0_i32_0 : i32, i32
  }
  func.func @transform_4(%arg0: i32) -> (i32, i32) {
    %c0_i32 = arith.constant 0 : i32
    %c0_i32_0 = arith.constant 0 : i32
    %c0_i32_1 = arith.constant 0 : i32
    return %c0_i32, %c0_i32_0 : i32, i32
  }
  func.func @transform_5(%arg0: i32) -> (i32, i32) {
    %c0_i32 = arith.constant 0 : i32
    %c0_i32_0 = arith.constant 0 : i32
    return %arg0, %c0_i32 : i32, i32
  }
}

</mosaic_0001>

<llo_original>
// kernel: tpu_custom_call.1
$region0: #{tpu_custom_call.1}
  #allocation0 [shape = 'u32[]', space=smem, size = 0x4, offset = 0x4, fixed_abs, tag = 'smem constant byte address 0x4 - core index']
  #allocation1 [shape = 'u32[144,128]{1,0:T(1,128)}', space=vmem, size = 0x12000, scoped, tag = 'internal scratch']
  %s0 = inlined_call_operand.vmem [shape: bf16[2,1024], index: 0, kind: input, shape index: {}]
  %s1 = inlined_call_operand.vmem [shape: bf16[1024,32], index: 1, kind: input, shape index: {}]
  %s2 = inlined_call_operand.vmem [shape: f32[1,32], index: 2, kind: input, shape index: {}]
  %s3 = inlined_call_operand.vmem [shape: bf16[32,128], index: 3, kind: input, shape index: {}]
  %s4 = inlined_call_operand.vmem [shape: f32[1,128], index: 4, kind: input, shape index: {}]
  %s5 = inlined_call_operand.hbm [shape: f32[2,128], index: 5, kind: output, shape index: {}]
  %s6 = sld [smem:[#allocation0]]
  $region30: #{tpu_custom_call.1} parent=0
    _
  %s8 = ssub.s32 1, %s6
  %s9 = scalar_select 0, %s8, %s6
  $region1: #{tpu_custom_call.1} parent=0
    #allocation2 [shape = 'u8[1024]{0}', space=vmem, size = 0x400, scoped, tag = 'output window, operand 0, single buffered']
    #allocation3 [shape = 's32[1]{0}', space=sflag, size = 0x4, scoped, tag = 'scoped memory for tpu_custom_call.1']
    %10 = vsyncpa [#allocation3], 0
    // Predicated region
    $region2: #{tpu_custom_call.1} parent=1 // pred_check
      _
    $region3: #{tpu_custom_call.1} parent=1 // pred_check_branch
      %12 = sbr.rel (0) target = $region5
    $region4: #{tpu_custom_call.1} parent=1 // pred_region
      _
    $region5: #{tpu_custom_call.1} parent=1 // pred_fallthru
      _
    // Predicated region
    $region6: #{tpu_custom_call.1} parent=1 // pred_check
      _
    $region7: #{tpu_custom_call.1} parent=1 // pred_check_branch
      %14 = sbr.rel (0) target = $region9
    $region8: #{tpu_custom_call.1} parent=1 // pred_region
      _
    $region9: #{tpu_custom_call.1} parent=1 // pred_fallthru
      _
    // Predicated region
    $region10: #{tpu_custom_call.1} parent=1 // pred_check
      _
    $region11: #{tpu_custom_call.1} parent=1 // pred_check_branch
      %16 = sbr.rel (0) target = $region13
    $region12: #{tpu_custom_call.1} parent=1 // pred_region
      _
    $region13: #{tpu_custom_call.1} parent=1 // pred_fallthru
      _
    // Predicated region
    $region14: #{tpu_custom_call.1} parent=1 // pred_check
      _
    $region15: #{tpu_custom_call.1} parent=1 // pred_check_branch
      %18 = sbr.rel (0) target = $region17
    $region16: #{tpu_custom_call.1} parent=1 // pred_region
      _
    $region17: #{tpu_custom_call.1} parent=1 // pred_fallthru
      _
    // Predicated region
    $region18: #{tpu_custom_call.1} parent=1 // pred_check
      _
    $region19: #{tpu_custom_call.1} parent=1 // pred_check_branch
      %20 = sbr.rel (0) target = $region21
    $region20: #{tpu_custom_call.1} parent=1 // pred_region
      _
    $region21: #{tpu_custom_call.1} parent=1 // pred_fallthru
      _
    %v22 = vld [vmem:[%s0] sm:$0xff]
    %v23 = vld [vmem:[%s1] sm:$0xf]
    %v24 = vld [vmem:[%s1 + $0x4] sm:$0xf]
    %v25 = vld [vmem:[%s1 + $0x8] sm:$0xf]
    %v26 = vld [vmem:[%s1 + $0xc] sm:$0xf]
    %v27 = vld [vmem:[%s1 + $0x10] sm:$0xf]
    %v28 = vld [vmem:[%s1 + $0x14] sm:$0xf]
    %v29 = vld [vmem:[%s1 + $0x18] sm:$0xf]
    %v30 = vld [vmem:[%s1 + $0x1c] sm:$0xf]
    %v31 = vld [vmem:[%s1 + $0x20] sm:$0xf]
    %v32 = vld [vmem:[%s1 + $0x24] sm:$0xf]
    %v33 = vld [vmem:[%s1 + $0x28] sm:$0xf]
    %v34 = vld [vmem:[%s1 + $0x2c] sm:$0xf]
    %v35 = vld [vmem:[%s1 + $0x30] sm:$0xf]
    %v36 = vld [vmem:[%s1 + $0x34] sm:$0xf]
    %v37 = vld [vmem:[%s1 + $0x38] sm:$0xf]
    %v38 = vld [vmem:[%s1 + $0x3c] sm:$0xf]
    %v39 = vld [vmem:[%s1 + $0x40] sm:$0xf]
    %v40 = vld [vmem:[%s1 + $0x44] sm:$0xf]
    %v41 = vld [vmem:[%s1 + $0x48] sm:$0xf]
    %v42 = vld [vmem:[%s1 + $0x4c] sm:$0xf]
    %v43 = vld [vmem:[%s1 + $0x50] sm:$0xf]
    %v44 = vld [vmem:[%s1 + $0x54] sm:$0xf]
    %v45 = vld [vmem:[%s1 + $0x58] sm:$0xf]
    %v46 = vld [vmem:[%s1 + $0x5c] sm:$0xf]
    %v47 = vld [vmem:[%s1 + $0x60] sm:$0xf]
    %v48 = vld [vmem:[%s1 + $0x64] sm:$0xf]
    %v49 = vld [vmem:[%s1 + $0x68] sm:$0xf]
    %v50 = vld [vmem:[%s1 + $0x6c] sm:$0xf]
    %v51 = vld [vmem:[%s1 + $0x70] sm:$0xf]
    %v52 = vld [vmem:[%s1 + $0x74] sm:$0xf]
    %v53 = vld [vmem:[%s1 + $0x78] sm:$0xf]
    %v54 = vld [vmem:[%s1 + $0x7c] sm:$0xf]
    %v55 = vld [vmem:[%s1 + $0x80] sm:$0xf]
    %v56 = vld [vmem:[%s1 + $0x84] sm:$0xf]
    %v57 = vld [vmem:[%s1 + $0x88] sm:$0xf]
    %v58 = vld [vmem:[%s1 + $0x8c] sm:$0xf]
    %v59 = vld [vmem:[%s1 + $0x90] sm:$0xf]
    %v60 = vld [vmem:[%s1 + $0x94] sm:$0xf]
    %v61 = vld [vmem:[%s1 + $0x98] sm:$0xf]
    %v62 = vld [vmem:[%s1 + $0x9c] sm:$0xf]
    %v63 = vld [vmem:[%s1 + $0xa0] sm:$0xf]
    %v64 = vld [vmem:[%s1 + $0xa4] sm:$0xf]
    %v65 = vld [vmem:[%s1 + $0xa8] sm:$0xf]
    %v66 = vld [vmem:[%s1 + $0xac] sm:$0xf]
    %v67 = vld [vmem:[%s1 + $0xb0] sm:$0xf]
    %v68 = vld [vmem:[%s1 + $0xb4] sm:$0xf]
    %v69 = vld [vmem:[%s1 + $0xb8] sm:$0xf]
    %v70 = vld [vmem:[%s1 + $0xbc] sm:$0xf]
    %v71 = vld [vmem:[%s1 + $0xc0] sm:$0xf]
    %v72 = vld [vmem:[%s1 + $0xc4] sm:$0xf]
    %v73 = vld [vmem:[%s1 + $0xc8] sm:$0xf]
    %v74 = vld [vmem:[%s1 + $0xcc] sm:$0xf]
    %v75 = vld [vmem:[%s1 + $0xd0] sm:$0xf]
    %v76 = vld [vmem:[%s1 + $0xd4] sm:$0xf]
    %v77 = vld [vmem:[%s1 + $0xd8] sm:$0xf]
    %v78 = vld [vmem:[%s1 + $0xdc] sm:$0xf]
    %v79 = vld [vmem:[%s1 + $0xe0] sm:$0xf]
    %v80 = vld [vmem:[%s1 + $0xe4] sm:$0xf]
    %v81 = vld [vmem:[%s1 + $0xe8] sm:$0xf]
    %v82 = vld [vmem:[%s1 + $0xec] sm:$0xf]
    %v83 = vld [vmem:[%s1 + $0xf0] sm:$0xf]
    %v84 = vld [vmem:[%s1 + $0xf4] sm:$0xf]
    %v85 = vld [vmem:[%s1 + $0xf8] sm:$0xf]
    %v86 = vld [vmem:[%s1 + $0xfc] sm:$0xf]
    %v87 = vld [vmem:[%s1 + $0x100] sm:$0xf]
    %v88 = vld [vmem:[%s1 + $0x104] sm:$0xf]
    %v89 = vld [vmem:[%s1 + $0x108] sm:$0xf]
    %v90 = vld [vmem:[%s1 + $0x10c] sm:$0xf]
    %v91 = vld [vmem:[%s1 + $0x110] sm:$0xf]
    %v92 = vld [vmem:[%s1 + $0x114] sm:$0xf]
    %v93 = vld [vmem:[%s1 + $0x118] sm:$0xf]
    %v94 = vld [vmem:[%s1 + $0x11c] sm:$0xf]
    %v95 = vld [vmem:[%s1 + $0x120] sm:$0xf]
    %v96 = vld [vmem:[%s1 + $0x124] sm:$0xf]
    %v97 = vld [vmem:[%s1 + $0x128] sm:$0xf]
    %v98 = vld [vmem:[%s1 + $0x12c] sm:$0xf]
    %v99 = vld [vmem:[%s1 + $0x130] sm:$0xf]
    %v100 = vld [vmem:[%s1 + $0x134] sm:$0xf]
    %v101 = vld [vmem:[%s1 + $0x138] sm:$0xf]
    %v102 = vld [vmem:[%s1 + $0x13c] sm:$0xf]
    %v103 = vld [vmem:[%s1 + $0x140] sm:$0xf]
    %v104 = vld [vmem:[%s1 + $0x144] sm:$0xf]
    %v105 = vld [vmem:[%s1 + $0x148] sm:$0xf]
    %v106 = vld [vmem:[%s1 + $0x14c] sm:$0xf]
    %v107 = vld [vmem:[%s1 + $0x150] sm:$0xf]
    %v108 = vld [vmem:[%s1 + $0x154] sm:$0xf]
    %v109 = vld [vmem:[%s1 + $0x158] sm:$0xf]
    %v110 = vld [vmem:[%s1 + $0x15c] sm:$0xf]
    %v111 = vld [vmem:[%s1 + $0x160] sm:$0xf]
    %v112 = vld [vmem:[%s1 + $0x164] sm:$0xf]
    %v113 = vld [vmem:[%s1 + $0x168] sm:$0xf]
    %v114 = vld [vmem:[%s1 + $0x16c] sm:$0xf]
    %v115 = vld [vmem:[%s1 + $0x170] sm:$0xf]
    %v116 = vld [vmem:[%s1 + $0x174] sm:$0xf]
    %v117 = vld [vmem:[%s1 + $0x178] sm:$0xf]
    %v118 = vld [vmem:[%s1 + $0x17c] sm:$0xf]
    %v119 = vld [vmem:[%s1 + $0x180] sm:$0xf]
    %v120 = vld [vmem:[%s1 + $0x184] sm:$0xf]
    %v121 = vld [vmem:[%s1 + $0x188] sm:$0xf]
    %v122 = vld [vmem:[%s1 + $0x18c] sm:$0xf]
    %v123 = vld [vmem:[%s1 + $0x190] sm:$0xf]
    %v124 = vld [vmem:[%s1 + $0x194] sm:$0xf]
    %v125 = vld [vmem:[%s1 + $0x198] sm:$0xf]
    %v126 = vld [vmem:[%s1 + $0x19c] sm:$0xf]
    %v127 = vld [vmem:[%s1 + $0x1a0] sm:$0xf]
    %v128 = vld [vmem:[%s1 + $0x1a4] sm:$0xf]
    %v129 = vld [vmem:[%s1 + $0x1a8] sm:$0xf]
    %v130 = vld [vmem:[%s1 + $0x1ac] sm:$0xf]
    %v131 = vld [vmem:[%s1 + $0x1b0] sm:$0xf]
    %v132 = vld [vmem:[%s1 + $0x1b4] sm:$0xf]
    %v133 = vld [vmem:[%s1 + $0x1b8] sm:$0xf]
    %v134 = vld [vmem:[%s1 + $0x1bc] sm:$0xf]
    %v135 = vld [vmem:[%s1 + $0x1c0] sm:$0xf]
    %v136 = vld [vmem:[%s1 + $0x1c4] sm:$0xf]
    %v137 = vld [vmem:[%s1 + $0x1c8] sm:$0xf]
    %v138 = vld [vmem:[%s1 + $0x1cc] sm:$0xf]
    %v139 = vld [vmem:[%s1 + $0x1d0] sm:$0xf]
    %v140 = vld [vmem:[%s1 + $0x1d4] sm:$0xf]
    %v141 = vld [vmem:[%s1 + $0x1d8] sm:$0xf]
    %v142 = vld [vmem:[%s1 + $0x1dc] sm:$0xf]
    %v143 = vld [vmem:[%s1 + $0x1e0] sm:$0xf]
    %v144 = vld [vmem:[%s1 + $0x1e4] sm:$0xf]
    %v145 = vld [vmem:[%s1 + $0x1e8] sm:$0xf]
    %v146 = vld [vmem:[%s1 + $0x1ec] sm:$0xf]
    %v147 = vld [vmem:[%s1 + $0x1f0] sm:$0xf]
    %v148 = vld [vmem:[%s1 + $0x1f4] sm:$0xf]
    %v149 = vld [vmem:[%s1 + $0x1f8] sm:$0xf]
    %v150 = vld [vmem:[%s1 + $0x1fc] sm:$0xf]
    %v151 = vld [vmem:[%s2] sm:$0x1]
    %v153 = vlaneseq
    %v154 = vshrl.u32 %v153, 7
    %v155 = vsub.s32 0, %v154
    %v156 = vrot.slane %v151, %v155
    %v159 = vcombine.high %v22, %v22
    %v161 = vunpack.c.l.s4 1966171168
    %v162 = vunpack.c.0.s8 %v161
    %v163 = vlaneseq
    %v164 = vshrl.u32 %v163, 7
    %v165 = vsub.s32 %v162, %v164
    %v166 = vrot.slane %v22, %v165
    %v168 = vunpack.c.l.s4 1966171168
    %v169 = vunpack.c.0.s8 %v168
    %v170 = vlaneseq
    %v171 = vshrl.u32 %v170, 7
    %v172 = vsub.s32 %v169, %v171
    %v173 = vrot.slane %v159, %v172
    %v174 = vcombine.high %v166, %v166
    %v175 = vcombine.high %v173, %v173
    %v177 = vunpack.c.l.s4 1966171168
    %v178 = vunpack.c.0.s8 %v177
    %v179 = vlaneseq
    %v180 = vshrl.u32 %v179, 7
    %v181 = vsub.s32 %v178, %v180
    %v182 = vrot.slane %v166, %v181
    %v184 = vunpack.c.l.s4 1966171168
    %v185 = vunpack.c.0.s8 %v184
    %v186 = vlaneseq
    %v187 = vshrl.u32 %v186, 7
    %v188 = vsub.s32 %v185, %v187
    %v189 = vrot.slane %v173, %v188
    %v191 = vunpack.c.l.s4 1966171168
    %v192 = vunpack.c.0.s8 %v191
    %v193 = vlaneseq
    %v194 = vshrl.u32 %v193, 7
    %v195 = vsub.s32 %v192, %v194
    %v196 = vrot.slane %v174, %v195
    %v198 = vunpack.c.l.s4 1966171168
    %v199 = vunpack.c.0.s8 %v198
    %v200 = vlaneseq
    %v201 = vshrl.u32 %v200, 7
    %v202 = vsub.s32 %v199, %v201
    %v203 = vrot.slane %v175, %v202
    %v204 = vcombine.high %v182, %v182
    %v205 = vcombine.high %v189, %v189
    %v206 = vcombine.high %v196, %v196
    %v207 = vcombine.high %v203, %v203
    %v344 = vunpack.c.l.b16 %v23
    %v345 = vunpack.c.l.b16 %v24
    %v346 = vunpack.c.l.b16 %v25
    %v347 = vunpack.c.l.b16 %v26
    %v348 = vunpack.c.l.b16 %v27
    %v349 = vunpack.c.l.b16 %v28
    %v350 = vunpack.c.l.b16 %v29
    %v351 = vunpack.c.l.b16 %v30
    %v352 = vunpack.c.l.b16 %v31
    %v353 = vunpack.c.l.b16 %v32
    %v354 = vunpack.c.l.b16 %v33
    %v355 = vunpack.c.l.b16 %v34
    %v356 = vunpack.c.l.b16 %v35
    %v357 = vunpack.c.l.b16 %v36
    %v358 = vunpack.c.l.b16 %v37
    %v359 = vunpack.c.l.b16 %v38
    %v360 = vunpack.c.l.b16 %v39
    %v361 = vunpack.c.l.b16 %v40
    %v362 = vunpack.c.l.b16 %v41
    %v363 = vunpack.c.l.b16 %v42
    %v364 = vunpack.c.l.b16 %v43
    %v365 = vunpack.c.l.b16 %v44
    %v366 = vunpack.c.l.b16 %v45
    %v367 = vunpack.c.l.b16 %v46
    %v368 = vunpack.c.l.b16 %v47
    %v369 = vunpack.c.l.b16 %v48
    %v370 = vunpack.c.l.b16 %v49
    %v371 = vunpack.c.l.b16 %v50
    %v372 = vunpack.c.l.b16 %v51
    %v373 = vunpack.c.l.b16 %v52
    %v374 = vunpack.c.l.b16 %v53
    %v375 = vunpack.c.l.b16 %v54
    %v376 = vunpack.c.l.b16 %v55
    %v377 = vunpack.c.l.b16 %v56
    %v378 = vunpack.c.l.b16 %v57
    %v379 = vunpack.c.l.b16 %v58
    %v380 = vunpack.c.l.b16 %v59
    %v381 = vunpack.c.l.b16 %v60
    %v382 = vunpack.c.l.b16 %v61
    %v383 = vunpack.c.l.b16 %v62
    %v384 = vunpack.c.l.b16 %v63
    %v385 = vunpack.c.l.b16 %v64
    %v386 = vunpack.c.l.b16 %v65
    %v387 = vunpack.c.l.b16 %v66
    %v388 = vunpack.c.l.b16 %v67
    %v389 = vunpack.c.l.b16 %v68
    %v390 = vunpack.c.l.b16 %v69
    %v391 = vunpack.c.l.b16 %v70
    %v392 = vunpack.c.l.b16 %v71
    %v393 = vunpack.c.l.b16 %v72
    %v394 = vunpack.c.l.b16 %v73
    %v395 = vunpack.c.l.b16 %v74
    %v396 = vunpack.c.l.b16 %v75
    %v397 = vunpack.c.l.b16 %v76
    %v398 = vunpack.c.l.b16 %v77
    %v399 = vunpack.c.l.b16 %v78
    %v400 = vunpack.c.l.b16 %v79
    %v401 = vunpack.c.l.b16 %v80
    %v402 = vunpack.c.l.b16 %v81
    %v403 = vunpack.c.l.b16 %v82
    %v404 = vunpack.c.l.b16 %v83
    %v405 = vunpack.c.l.b16 %v84
    %v406 = vunpack.c.l.b16 %v85
    %v407 = vunpack.c.l.b16 %v86
    %v408 = vunpack.c.l.b16 %v87
    %v409 = vunpack.c.l.b16 %v88
    %v410 = vunpack.c.l.b16 %v89
    %v411 = vunpack.c.l.b16 %v90
    %v412 = vunpack.c.l.b16 %v91
    %v413 = vunpack.c.l.b16 %v92
    %v414 = vunpack.c.l.b16 %v93
    %v415 = vunpack.c.l.b16 %v94
    %v416 = vunpack.c.l.b16 %v95
    %v417 = vunpack.c.l.b16 %v96
    %v418 = vunpack.c.l.b16 %v97
    %v419 = vunpack.c.l.b16 %v98
    %v420 = vunpack.c.l.b16 %v99
    %v421 = vunpack.c.l.b16 %v100
    %v422 = vunpack.c.l.b16 %v101
    %v423 = vunpack.c.l.b16 %v102
    %v424 = vunpack.c.l.b16 %v103
    %v425 = vunpack.c.l.b16 %v104
    %v426 = vunpack.c.l.b16 %v105
    %v427 = vunpack.c.l.b16 %v106
    %v428 = vunpack.c.l.b16 %v107
    %v429 = vunpack.c.l.b16 %v108
    %v430 = vunpack.c.l.b16 %v109
    %v431 = vunpack.c.l.b16 %v110
    %v432 = vunpack.c.l.b16 %v111
    %v433 = vunpack.c.l.b16 %v112
    %v434 = vunpack.c.l.b16 %v113
    %v435 = vunpack.c.l.b16 %v114
    %v436 = vunpack.c.l.b16 %v115
    %v437 = vunpack.c.l.b16 %v116
    %v438 = vunpack.c.l.b16 %v117
    %v439 = vunpack.c.l.b16 %v118
    %v440 = vunpack.c.l.b16 %v119
    %v441 = vunpack.c.l.b16 %v120
    %v442 = vunpack.c.l.b16 %v121
    %v443 = vunpack.c.l.b16 %v122
    %v444 = vunpack.c.l.b16 %v123
    %v445 = vunpack.c.l.b16 %v124
    %v446 = vunpack.c.l.b16 %v125
    %v447 = vunpack.c.l.b16 %v126
    %v448 = vunpack.c.l.b16 %v127
    %v449 = vunpack.c.l.b16 %v128
    %v450 = vunpack.c.l.b16 %v129
    %v451 = vunpack.c.l.b16 %v130
    %v452 = vunpack.c.l.b16 %v131
    %v453 = vunpack.c.l.b16 %v132
    %v454 = vunpack.c.l.b16 %v133
    %v455 = vunpack.c.l.b16 %v134
    %v456 = vunpack.c.l.b16 %v135
    %v457 = vunpack.c.l.b16 %v136
    %v458 = vunpack.c.l.b16 %v137
    %v459 = vunpack.c.l.b16 %v138
    %v460 = vunpack.c.l.b16 %v139
    %v461 = vunpack.c.l.b16 %v140
    %v462 = vunpack.c.l.b16 %v141
    %v463 = vunpack.c.l.b16 %v142
    %v464 = vunpack.c.l.b16 %v143
    %v465 = vunpack.c.l.b16 %v144
    %v466 = vunpack.c.l.b16 %v145
    %v467 = vunpack.c.l.b16 %v146
    %v468 = vunpack.c.l.b16 %v147
    %v469 = vunpack.c.l.b16 %v148
    %v470 = vunpack.c.l.b16 %v149
    %v471 = vunpack.c.l.b16 %v150
    %v472 = vpack.c.b16 %v345, %v344
    %v473 = vpack.c.b16 %v347, %v346
    %v474 = vpack.c.b16 %v349, %v348
    %v475 = vpack.c.b16 %v351, %v350
    %v476 = vpack.c.b16 %v353, %v352
    %v477 = vpack.c.b16 %v355, %v354
    %v478 = vpack.c.b16 %v357, %v356
    %v479 = vpack.c.b16 %v359, %v358
    %v480 = vpack.c.b16 %v361, %v360
    %v481 = vpack.c.b16 %v363, %v362
    %v482 = vpack.c.b16 %v365, %v364
    %v483 = vpack.c.b16 %v367, %v366
    %v484 = vpack.c.b16 %v369, %v368
    %v485 = vpack.c.b16 %v371, %v370
    %v486 = vpack.c.b16 %v373, %v372
    %v487 = vpack.c.b16 %v375, %v374
    %v488 = vpack.c.b16 %v377, %v376
    %v489 = vpack.c.b16 %v379, %v378
    %v490 = vpack.c.b16 %v381, %v380
    %v491 = vpack.c.b16 %v383, %v382
    %v492 = vpack.c.b16 %v385, %v384
    %v493 = vpack.c.b16 %v387, %v386
    %v494 = vpack.c.b16 %v389, %v388
    %v495 = vpack.c.b16 %v391, %v390
    %v496 = vpack.c.b16 %v393, %v392
    %v497 = vpack.c.b16 %v395, %v394
    %v498 = vpack.c.b16 %v397, %v396
    %v499 = vpack.c.b16 %v399, %v398
    %v500 = vpack.c.b16 %v401, %v400
    %v501 = vpack.c.b16 %v403, %v402
    %v502 = vpack.c.b16 %v405, %v404
    %v503 = vpack.c.b16 %v407, %v406
    %v504 = vpack.c.b16 %v409, %v408
    %v505 = vpack.c.b16 %v411, %v410
    %v506 = vpack.c.b16 %v413, %v412
    %v507 = vpack.c.b16 %v415, %v414
    %v508 = vpack.c.b16 %v417, %v416
    %v509 = vpack.c.b16 %v419, %v418
    %v510 = vpack.c.b16 %v421, %v420
    %v511 = vpack.c.b16 %v423, %v422
    %v512 = vpack.c.b16 %v425, %v424
    %v513 = vpack.c.b16 %v427, %v426
    %v514 = vpack.c.b16 %v429, %v428
    %v515 = vpack.c.b16 %v431, %v430
    %v516 = vpack.c.b16 %v433, %v432
    %v517 = vpack.c.b16 %v435, %v434
    %v518 = vpack.c.b16 %v437, %v436
    %v519 = vpack.c.b16 %v439, %v438
    %v520 = vpack.c.b16 %v441, %v440
    %v521 = vpack.c.b16 %v443, %v442
    %v522 = vpack.c.b16 %v445, %v444
    %v523 = vpack.c.b16 %v447, %v446
    %v524 = vpack.c.b16 %v449, %v448
    %v525 = vpack.c.b16 %v451, %v450
    %v526 = vpack.c.b16 %v453, %v452
    %v527 = vpack.c.b16 %v455, %v454
    %v528 = vpack.c.b16 %v457, %v456
    %v529 = vpack.c.b16 %v459, %v458
    %v530 = vpack.c.b16 %v461, %v460
    %v531 = vpack.c.b16 %v463, %v462
    %v532 = vpack.c.b16 %v465, %v464
    %v533 = vpack.c.b16 %v467, %v466
    %v534 = vpack.c.b16 %v469, %v468
    %v535 = vpack.c.b16 %v471, %v470
    %600 = vmatprep.subr.bf16.mxu0 0
    %601 = vmatpush1.bf16.msra.mxu0 %v479
    %602 = vmatprep.subr.bf16.mxu0 0
    %603 = vmatpush1.bf16.msra.mxu0 %v478
    %604 = vmatprep.subr.bf16.mxu0 0
    %605 = vmatpush1.bf16.msra.mxu0 %v477
    %606 = vmatprep.subr.bf16.mxu0 0
    %607 = vmatpush1.bf16.msra.mxu0 %v476
    %608 = vmatprep.subr.bf16.mxu0 0
    %609 = vmatpush1.bf16.msra.mxu0 %v475
    %610 = vmatprep.subr.bf16.mxu0 0
    %611 = vmatpush1.bf16.msra.mxu0 %v474
    %612 = vmatprep.subr.bf16.mxu0 0
    %613 = vmatpush1.bf16.msra.mxu0 %v473
    %614 = vmatprep.subr.bf16.mxu0 0
    %615 = vmatpush1.bf16.msra.mxu0 %v472
    %616 = vmatprep.subr.bf16.mxu0 0
    %617 = vmatpush2.bf16.msra.mxu0 %v487
    %618 = vmatprep.subr.bf16.mxu0 0
    %619 = vmatpush2.bf16.msra.mxu0 %v486
    %620 = vmatprep.subr.bf16.mxu0 0
    %621 = vmatpush2.bf16.msra.mxu0 %v485
    %622 = vmatprep.subr.bf16.mxu0 0
    %623 = vmatpush2.bf16.msra.mxu0 %v484
    %624 = vmatprep.subr.bf16.mxu0 0
    %625 = vmatpush2.bf16.msra.mxu0 %v483
    %626 = vmatprep.subr.bf16.mxu0 0
    %627 = vmatpush2.bf16.msra.mxu0 %v482
    %628 = vmatprep.subr.bf16.mxu0 0
    %629 = vmatpush2.bf16.msra.mxu0 %v481
    %630 = vmatprep.subr.bf16.mxu0 0
    %631 = vmatpush2.bf16.msra.mxu0 %v480
    %632 = vmatprep.mubr.bf16.mxu0 %v196
    %633 = vmatmul.mubr.bf16.gmra.mxu0 %v182
    %v634 = vpop.f32.mrf.mxu0
    %v635 = vadd.f32 %v156, %v634
    %v636 = vpop.f32.mrf.mxu0
    %v637 = vpop.f32.mrf.mxu0
    %v638 = vpop.f32.mrf.mxu0
    %639 = vdwg.mxu0
    %640 = vmatprep.subr.bf16.mxu0 0
    %641 = vmatpush1.bf16.msra.mxu0 %v495
    %642 = vmatprep.subr.bf16.mxu0 0
    %643 = vmatpush1.bf16.msra.mxu0 %v494
    %644 = vmatprep.subr.bf16.mxu0 0
    %645 = vmatpush1.bf16.msra.mxu0 %v493
    %646 = vmatprep.subr.bf16.mxu0 0
    %647 = vmatpush1.bf16.msra.mxu0 %v492
    %648 = vmatprep.subr.bf16.mxu0 0
    %649 = vmatpush1.bf16.msra.mxu0 %v491
    %650 = vmatprep.subr.bf16.mxu0 0
    %651 = vmatpush1.bf16.msra.mxu0 %v490
    %652 = vmatprep.subr.bf16.mxu0 0
    %653 = vmatpush1.bf16.msra.mxu0 %v489
    %654 = vmatprep.subr.bf16.mxu0 0
    %655 = vmatpush1.bf16.msra.mxu0 %v488
    %656 = vmatprep.subr.bf16.mxu0 0
    %657 = vmatpush2.bf16.msra.mxu0 %v503
    %658 = vmatprep.subr.bf16.mxu0 0
    %659 = vmatpush2.bf16.msra.mxu0 %v502
    %660 = vmatprep.subr.bf16.mxu0 0
    %661 = vmatpush2.bf16.msra.mxu0 %v501
    %662 = vmatprep.subr.bf16.mxu0 0
    %663 = vmatpush2.bf16.msra.mxu0 %v500
    %664 = vmatprep.subr.bf16.mxu0 0
    %665 = vmatpush2.bf16.msra.mxu0 %v499
    %666 = vmatprep.subr.bf16.mxu0 0
    %667 = vmatpush2.bf16.msra.mxu0 %v498
    %668 = vmatprep.subr.bf16.mxu0 0
    %669 = vmatpush2.bf16.msra.mxu0 %v497
    %670 = vmatprep.subr.bf16.mxu0 0
    %671 = vmatpush2.bf16.msra.mxu0 %v496
    %672 = vmatprep.mubr.bf16.mxu0 %v206
    %673 = vmatmul.mubr.bf16.gmra.mxu0 %v204
    %v674 = vpop.f32.mrf.mxu0
    %v675 = vadd.f32 %v635, %v674
    %v676 = vpop.f32.mrf.mxu0
    %v677 = vpop.f32.mrf.mxu0
    %v678 = vpop.f32.mrf.mxu0
    %679 = vdwg.mxu0
    %680 = vmatprep.subr.bf16.mxu0 0
    %681 = vmatpush1.bf16.msra.mxu0 %v511
    %682 = vmatprep.subr.bf16.mxu0 0
    %683 = vmatpush1.bf16.msra.mxu0 %v510
    %684 = vmatprep.subr.bf16.mxu0 0
    %685 = vmatpush1.bf16.msra.mxu0 %v509
    %686 = vmatprep.subr.bf16.mxu0 0
    %687 = vmatpush1.bf16.msra.mxu0 %v508
    %688 = vmatprep.subr.bf16.mxu0 0
    %689 = vmatpush1.bf16.msra.mxu0 %v507
    %690 = vmatprep.subr.bf16.mxu0 0
    %691 = vmatpush1.bf16.msra.mxu0 %v506
    %692 = vmatprep.subr.bf16.mxu0 0
    %693 = vmatpush1.bf16.msra.mxu0 %v505
    %694 = vmatprep.subr.bf16.mxu0 0
    %695 = vmatpush1.bf16.msra.mxu0 %v504
    %696 = vmatprep.subr.bf16.mxu0 0
    %697 = vmatpush2.bf16.msra.mxu0 %v519
    %698 = vmatprep.subr.bf16.mxu0 0
    %699 = vmatpush2.bf16.msra.mxu0 %v518
    %700 = vmatprep.subr.bf16.mxu0 0
    %701 = vmatpush2.bf16.msra.mxu0 %v517
    %702 = vmatprep.subr.bf16.mxu0 0
    %703 = vmatpush2.bf16.msra.mxu0 %v516
    %704 = vmatprep.subr.bf16.mxu0 0
    %705 = vmatpush2.bf16.msra.mxu0 %v515
    %706 = vmatprep.subr.bf16.mxu0 0
    %707 = vmatpush2.bf16.msra.mxu0 %v514
    %708 = vmatprep.subr.bf16.mxu0 0
    %709 = vmatpush2.bf16.msra.mxu0 %v513
    %710 = vmatprep.subr.bf16.mxu0 0
    %711 = vmatpush2.bf16.msra.mxu0 %v512
    %712 = vmatprep.mubr.bf16.mxu0 %v203
    %713 = vmatmul.mubr.bf16.gmra.mxu0 %v189
    %v714 = vpop.f32.mrf.mxu0
    %v715 = vadd.f32 %v675, %v714
    %v716 = vpop.f32.mrf.mxu0
    %v717 = vpop.f32.mrf.mxu0
    %v718 = vpop.f32.mrf.mxu0
    %719 = vdwg.mxu0
    %720 = vmatprep.subr.bf16.mxu0 0
    %721 = vmatpush1.bf16.msra.mxu0 %v527
    %722 = vmatprep.subr.bf16.mxu0 0
    %723 = vmatpush1.bf16.msra.mxu0 %v526
    %724 = vmatprep.subr.bf16.mxu0 0
    %725 = vmatpush1.bf16.msra.mxu0 %v525
    %726 = vmatprep.subr.bf16.mxu0 0
    %727 = vmatpush1.bf16.msra.mxu0 %v524
    %728 = vmatprep.subr.bf16.mxu0 0
    %729 = vmatpush1.bf16.msra.mxu0 %v523
    %730 = vmatprep.subr.bf16.mxu0 0
    %731 = vmatpush1.bf16.msra.mxu0 %v522
    %732 = vmatprep.subr.bf16.mxu0 0
    %733 = vmatpush1.bf16.msra.mxu0 %v521
    %734 = vmatprep.subr.bf16.mxu0 0
    %735 = vmatpush1.bf16.msra.mxu0 %v520
    %736 = vmatprep.subr.bf16.mxu0 0
    %737 = vmatpush2.bf16.msra.mxu0 %v535
    %738 = vmatprep.subr.bf16.mxu0 0
    %739 = vmatpush2.bf16.msra.mxu0 %v534
    %740 = vmatprep.subr.bf16.mxu0 0
    %741 = vmatpush2.bf16.msra.mxu0 %v533
    %742 = vmatprep.subr.bf16.mxu0 0
    %743 = vmatpush2.bf16.msra.mxu0 %v532
    %744 = vmatprep.subr.bf16.mxu0 0
    %745 = vmatpush2.bf16.msra.mxu0 %v531
    %746 = vmatprep.subr.bf16.mxu0 0
    %747 = vmatpush2.bf16.msra.mxu0 %v530
    %748 = vmatprep.subr.bf16.mxu0 0
    %749 = vmatpush2.bf16.msra.mxu0 %v529
    %750 = vmatprep.subr.bf16.mxu0 0
    %751 = vmatpush2.bf16.msra.mxu0 %v528
    %752 = vmatprep.mubr.bf16.mxu0 %v207
    %753 = vmatmul.mubr.bf16.gmra.mxu0 %v205
    %v754 = vpop.f32.mrf.mxu0
    %v755 = vadd.f32 %v715, %v754
    %v756 = vpop.f32.mrf.mxu0
    %v757 = vpop.f32.mrf.mxu0
    %v758 = vpop.f32.mrf.mxu0
    %759 = vdwg.mxu0
    %v760 = vtanh.pop %v755
    %v761 = vpack.c.bf16 %v760, %v760
    %v762 = vld [vmem:[%s3] sm:$0xf]
    %v763 = vld [vmem:[%s3 + $0x4] sm:$0xf]
    %v764 = vld [vmem:[%s3 + $0x8] sm:$0xf]
    %v765 = vld [vmem:[%s3 + $0xc] sm:$0xf]
    %v766 = vld [vmem:[%s4] sm:$0x1]
    %v768 = vlaneseq
    %v769 = vshrl.u32 %v768, 7
    %v770 = vsub.s32 0, %v769
    %v771 = vrot.slane %v766, %v770
    %v777 = vunpack.c.l.b16 %v762
    %v778 = vunpack.c.l.b16 %v763
    %v779 = vunpack.c.l.b16 %v764
    %v780 = vunpack.c.l.b16 %v765
    %v781 = vpack.c.b16 %v778, %v777
    %v782 = vpack.c.b16 %v780, %v779
    %vm785 = vcmask 261120
    %v787 = vsel %vm785, %v761, 0
    %789 = vmatprep.subr.bf16.mxu0 0
    %790 = vmatpush1.bf16.msra.mxu0 0
    %791 = vmatprep.subr.bf16.mxu0 0
    %792 = vmatpush1.bf16.msra.mxu0 0
    %793 = vmatprep.subr.bf16.mxu0 0
    %794 = vmatpush1.bf16.msra.mxu0 0
    %795 = vmatprep.subr.bf16.mxu0 0
    %796 = vmatpush1.bf16.msra.mxu0 0
    %797 = vmatprep.subr.bf16.mxu0 0
    %798 = vmatpush1.bf16.msra.mxu0 0
    %799 = vmatprep.subr.bf16.mxu0 0
    %800 = vmatpush1.bf16.msra.mxu0 0
    %801 = vmatprep.subr.bf16.mxu0 0
    %802 = vmatpush1.bf16.msra.mxu0 %v782
    %803 = vmatprep.subr.bf16.mxu0 0
    %804 = vmatpush1.bf16.msra.mxu0 %v781
    %805 = vmatprep.subr.bf16.mxu0 0
    %806 = vmatpush2.bf16.msra.mxu0 0
    %807 = vmatprep.subr.bf16.mxu0 0
    %808 = vmatpush2.bf16.msra.mxu0 0
    %809 = vmatprep.subr.bf16.mxu0 0
    %810 = vmatpush2.bf16.msra.mxu0 0
    %811 = vmatprep.subr.bf16.mxu0 0
    %812 = vmatpush2.bf16.msra.mxu0 0
    %813 = vmatprep.subr.bf16.mxu0 0
    %814 = vmatpush2.bf16.msra.mxu0 0
    %815 = vmatprep.subr.bf16.mxu0 0
    %816 = vmatpush2.bf16.msra.mxu0 0
    %817 = vmatprep.subr.bf16.mxu0 0
    %818 = vmatpush2.bf16.msra.mxu0 0
    %819 = vmatprep.subr.bf16.mxu0 0
    %820 = vmatpush2.bf16.msra.mxu0 0
    %821 = vmatprep.mubr.bf16.mxu0 0
    %822 = vmatmul.mubr.bf16.gmra.mxu0 %v787
    %v823 = vpop.f32.mrf.mxu0
    %v824 = vadd.f32 %v771, %v823
    %v825 = vpop.f32.mrf.mxu0
    %v826 = vpop.f32.mrf.mxu0
    %v827 = vpop.f32.mrf.mxu0
    %828 = vdwg.mxu0
    %v829 = vmax.f32 %v824, -2.5
    %v830 = vmin.f32 %v829, 2.5
    %831 = vst [vmem:[#allocation2] sm:$0x3] %v830
    // Predicated region
    $region22: #{tpu_custom_call.1} parent=1 // pred_check
      _
    $region23: #{tpu_custom_call.1} parent=1 // pred_check_branch
      %833 = sbr.rel (0) target = $region25
    $region24: #{tpu_custom_call.1} parent=1 // pred_region
      %s835 = ssub.s32 32, 32
      %836 = vsyncadd [#allocation3], %s835
      %s838 = sshll.u32 [#allocation2], 4
      %s839 = int_to_ptr.vmem [resolvable:$true] %s838
      %841 = dma.vmem_to_hbm [thread:$0]  %s839, 32, %s5, [#allocation3]
    $region25: #{tpu_custom_call.1} parent=1 // pred_fallthru
      _
    // Predicated region
    $region26: #{tpu_custom_call.1} parent=1 // pred_check
      _
    $region27: #{tpu_custom_call.1} parent=1 // pred_check_branch
      %843 = sbr.rel (0) target = $region29
    $region28: #{tpu_custom_call.1} parent=1 // pred_region
      %844 = dma.done [#allocation3], 32
    $region29: #{tpu_custom_call.1} parent=1 // pred_fallthru
      _
    %845 = vsyncpa [#allocation3], 1

</llo_original>
